<compile_context>
chip_gen: v6e
topology: v6e:2x2x1
jax: 0.10.0
libtpu: 0.0.40
codegen_flags: <defaults>
</compile_context>

<pallas_src>
import math

import jax
import jax.numpy as jnp
from jax.experimental import pallas as pl
from jax.experimental.pallas import tpu as pltpu

EPS = 1e-5

# Optional extra input buffering (pl.Buffered(3)) -- enable only if xprof shows
# exposed DMA at block boundaries (read waiting behind writeback).
_EXTRA_INPUT_BUFFERING = False


def _cdiv(a, b):
    return -(-a // b)


def _hw_config():
    """(vmem_limit_bytes, target_block_bytes) chosen per TPU generation."""
    vmem_phys = None
    try:
        info = pltpu.get_tpu_info()
        vmem_phys = int(getattr(info, "vmem_capacity_bytes", 0)) or None
    except Exception:
        vmem_phys = None
    if vmem_phys is not None and vmem_phys >= (100 << 20):
        # v5e / v6e: 128 MiB physical VMEM -> raise the scoped limit, big blocks.
        return 64 << 20, 4 << 20
    # v7x (64 MiB physical per TC) or unknown: 32 MiB scoped limit is legal on
    # every generation and still well above the v5e 16 MiB default.
    return 32 << 20, 4 << 20


def _sublane_multiple(dtype):
    """Rows per sublane tile: f32 -> 8, bf16 -> 16, int8/fp8 -> 32."""
    itemsize = jnp.dtype(dtype).itemsize
    return max(1, 4 // itemsize) * 8


def _choose_tile_tokens(l, c, dtype, batch, target_block_bytes):
    """Tokens per channels-first block: lane-dense (multiple of 128), ~target
    bytes of VMEM per buffer counting dtype-aware sublane padding, and never a
    single-step grid when the token axis can be split (v7x has 2 TensorCores)."""
    itemsize = jnp.dtype(dtype).itemsize
    sub = _sublane_multiple(dtype)
    c_pad = _cdiv(c, sub) * sub
    t = target_block_bytes // max(1, c_pad * itemsize)
    t = max(128, (t // 128) * 128)
    if t > l:
        t = l
    if batch * _cdiv(l, t) < 2 and l >= 2 * 128:
        t = _cdiv(_cdiv(l, 2), 128) * 128
    return min(t, l)


def _choose_tile_rows(n, c, dtype, target_block_bytes):
    """Rows per channels-last block: multiple of the sublane pack, ~target bytes
    of VMEM per buffer counting lane padding of the (full) last dim."""
    itemsize = jnp.dtype(dtype).itemsize
    sub = _sublane_multiple(dtype)
    c_lanes = _cdiv(c, 128) * 128
    rows = target_block_bytes // max(1, c_lanes * itemsize)
    rows = max(sub, (rows // sub) * sub)
    if rows >= n:
        if n >= 2 * sub:
            # keep >= 2 grid steps so both v7x TensorCores get work
            half = _cdiv(n, 2)
            return _cdiv(half, sub) * sub
        return n
    return rows


def _channel_moments(x, c):
    """Per-token mean and mean-of-squares over the (sublane) channel axis.
    x: (C, T) f32 -> (mu, ex2), each (1, T).  Unrolled row-by-row so no
    block-sized squared temp is materialized (c is static and tiny in ctcnet)."""
    if c <= 16:
        row = x[0:1, :]
        s = row
        s2 = row * row
        for i in range(1, c):
            row = x[i:i + 1, :]
            s = s + row
            s2 = s2 + row * row
    else:
        s = jnp.sum(x, axis=0, keepdims=True)
        s2 = jnp.sum(x * x, axis=0, keepdims=True)
    inv_c = 1.0 / c
    return s * inv_c, s2 * inv_c


def _ln_cf_kernel(x_ref, wb_ref, o_ref):
    # x_ref/o_ref: (C, TILE_TOK) block (channels on sublanes, tokens on lanes)
    # wb_ref:      (2, C, 1) packed [weight; bias], f32
    x = x_ref[...].astype(jnp.float32)
    c = x.shape[0]
    mu, ex2 = _channel_moments(x, c)                 # (1, T) each
    var = jnp.maximum(ex2 - mu * mu, 0.0)            # one-pass, clamp rounding
    rstd = jax.lax.rsqrt(var + EPS)                  # EUP slot
    w = wb_ref[0]                                    # (C, 1)
    b = wb_ref[1]                                    # (C, 1)
    scale = w * rstd                                 # (C, T)
    o_ref[...] = ((x - mu) * scale + b).astype(o_ref.dtype)


def _ln_cl_kernel(x_ref, wb_ref, o_ref):
    # x_ref/o_ref: (TILE_ROWS, C) block (normalized dim on lanes)
    # wb_ref:      (2, C) packed [weight; bias], f32
    x = x_ref[...].astype(jnp.float32)
    c = x.shape[-1]
    inv_c = 1.0 / c
    mu = jnp.sum(x, axis=-1, keepdims=True) * inv_c
    ex2 = jnp.sum(x * x, axis=-1, keepdims=True) * inv_c
    var = jnp.maximum(ex2 - mu * mu, 0.0)
    rstd = jax.lax.rsqrt(var + EPS)
    w = wb_ref[0:1, :]
    b = wb_ref[1:2, :]
    o_ref[...] = ((x - mu) * rstd * w + b).astype(o_ref.dtype)


def _layernorm_channels_first(x3, weight, bias):
    """LayerNorm over axis 1 of a (B, C, L) array (channels-first, lane-dense)."""
    b, c, l = x3.shape
    assert weight.shape == (c,) and bias.shape == (c,)
    wb = jnp.stack([weight, bias], axis=0).astype(jnp.float32).reshape(2, c, 1)

    vmem_limit, target = _hw_config()
    tile_t = _choose_tile_tokens(l, c, x3.dtype, b, target)
    grid = (b, pl.cdiv(l, tile_t))
    itemsize = jnp.dtype(x3.dtype).itemsize

    if _EXTRA_INPUT_BUFFERING:
        x_spec = pl.BlockSpec((None, c, tile_t), lambda bi, ti: (bi, 0, ti),
                              pipeline_mode=pl.Buffered(3))
    else:
        x_spec = pl.BlockSpec((None, c, tile_t), lambda bi, ti: (bi, 0, ti))

    return pl.pallas_call(
        _ln_cf_kernel,
        out_shape=jax.ShapeDtypeStruct((b, c, l), x3.dtype),
        grid_spec=pltpu.PrefetchScalarGridSpec(
            num_scalar_prefetch=0,
            grid=grid,
            in_specs=[
                x_spec,
                pl.BlockSpec((2, c, 1), lambda bi, ti: (0, 0, 0)),
            ],
            out_specs=pl.BlockSpec((None, c, tile_t), lambda bi, ti: (bi, 0, ti)),
        ),
        compiler_params=pltpu.CompilerParams(
            dimension_semantics=("parallel", "parallel"),
            vmem_limit_bytes=vmem_limit,
        ),
        cost_estimate=pl.CostEstimate(
            flops=8 * b * c * l,
            transcendentals=b * l,
            bytes_accessed=2 * b * c * l * itemsize + 8 * c,
        ),
    )(x3, wb)


def _layernorm_last_dim_2d(x2, weight, bias):
    """LayerNorm over the last dim of an (N, C) array -- no relayout passes."""
    n, c = x2.shape
    assert weight.shape == (c,) and bias.shape == (c,)
    wb = jnp.stack([weight, bias], axis=0).astype(jnp.float32)  # (2, C)

    vmem_limit, target = _hw_config()
    tile_n = _choose_tile_rows(n, c, x2.dtype, target)
    grid = (pl.cdiv(n, tile_n),)
    itemsize = jnp.dtype(x2.dtype).itemsize

    return pl.pallas_call(
        _ln_cl_kernel,
        out_shape=jax.ShapeDtypeStruct((n, c), x2.dtype),
        grid_spec=pltpu.PrefetchScalarGridSpec(
            num_scalar_prefetch=0,
            grid=grid,
            in_specs=[
                pl.BlockSpec((tile_n, c), lambda i: (i, 0)),
                pl.BlockSpec((2, c), lambda i: (0, 0)),
            ],
            out_specs=pl.BlockSpec((tile_n, c), lambda i: (i, 0)),
        ),
        compiler_params=pltpu.CompilerParams(
            dimension_semantics=("parallel",),
            vmem_limit_bytes=vmem_limit,
        ),
        cost_estimate=pl.CostEstimate(
            flops=8 * n * c,
            transcendentals=n,
            bytes_accessed=2 * n * c * itemsize + 8 * c,
        ),
    )(x2, wb)


def with_bias_layernorm(x, weight, bias):
    """Module-spec API: LayerNorm over the LAST dim of x (any leading shape).
    Normalizes in place over the trailing dim -- no transpose round-trips.  For
    tiny C (e.g. ctcnet's C=4) prefer with_bias_layernorm_nchw(), which keeps the
    normalized axis on sublanes and stays fully lane-dense."""
    c = x.shape[-1]
    n = math.prod(x.shape[:-1]) if x.ndim > 1 else 1
    out = _layernorm_last_dim_2d(x.reshape(n, c), weight, bias)
    return out.reshape(x.shape)


def with_bias_layernorm_nchw(x_nchw, weight, bias):
    """ctcnet usage: to_4d(WithBias_LayerNorm(to_3d(x))) on NCHW x, no transposes.
    This is the fast path: channels-first blocks, unmasked 128-lane stores."""
    b, c, h, w = x_nchw.shape
    out = _layernorm_channels_first(x_nchw.reshape(b, c, h * w), weight, bias)
    return out.reshape(b, c, h, w)


def reference_layernorm(x, weight, bias):
    mu = jnp.mean(x, axis=-1, keepdims=True)
    var = jnp.mean((x - mu) ** 2, axis=-1, keepdims=True)
    return (x - mu) / jnp.sqrt(var + EPS) * weight + bias


if __name__ == "__main__":
    key = jax.random.PRNGKey(0)
    kx, kw, kb = jax.random.split(key, 3)

    B, C, H, W = 2, 4, 16, 16
    x_nchw = jax.random.normal(kx, (B, C, H, W), dtype=jnp.float32)
    weight = 1.0 + 0.1 * jax.random.normal(kw, (C,), dtype=jnp.float32)
    bias = 0.1 * jax.random.normal(kb, (C,), dtype=jnp.float32)

    # Reference: module semantics (normalize over last dim of to_3d(x)).
    x_3d = jnp.transpose(x_nchw, (0, 2, 3, 1)).reshape(B, H * W, C)
    ref_3d = reference_layernorm(x_3d, weight, bias)
    ref_nchw = jnp.transpose(ref_3d.reshape(B, H, W, C), (0, 3, 1, 2))

    # 1) Fused NCHW fast path (what ctcnet actually feeds this module).
    out_nchw = jax.block_until_ready(with_bias_layernorm_nchw(x_nchw, weight, bias))
    assert out_nchw.shape == x_nchw.shape
    assert jnp.allclose(out_nchw, ref_nchw, atol=1e-5, rtol=1e-5), "nchw mismatch"

    # 2) Module-signature path (normalize over the last dim, no transposes).
    out_3d = jax.block_until_ready(with_bias_layernorm(x_3d, weight, bias))
    assert out_3d.shape == x_3d.shape
    assert jnp.allclose(out_3d, ref_3d, atol=1e-5, rtol=1e-5), "last-dim mismatch"

    # 3) Module-signature path at a different small shape (seq=8, hidden=32).
    kx2, kw2, kb2 = jax.random.split(jax.random.PRNGKey(0), 3)
    x2 = jax.random.normal(kx2, (2, 8, 32), dtype=jnp.float32)
    w2 = 1.0 + 0.1 * jax.random.normal(kw2, (32,), dtype=jnp.float32)
    b2 = 0.1 * jax.random.normal(kb2, (32,), dtype=jnp.float32)
    ref2 = reference_layernorm(x2, w2, b2)
    out2 = jax.block_until_ready(with_bias_layernorm(x2, w2, b2))
    assert jnp.allclose(out2, ref2, atol=1e-5, rtol=1e-5), "hidden=32 mismatch"

    print("KERNEL_OK")
</pallas_src>

<mosaic_0001>
module attributes {stable_mosaic.version = 11 : i64} {
  func.func @_ln_cf_kernel(%arg0: i32, %arg1: i32, %arg2: memref<1x4x256xf32, #tpu.memory_space<vmem>>, %arg3: memref<2x4x1xf32, #tpu.memory_space<vmem>>, %arg4: memref<1x4x256xf32, #tpu.memory_space<vmem>>) attributes {dimension_semantics = [#tpu.dimension_semantics<parallel>, #tpu.dimension_semantics<parallel>], iteration_bounds = array<i64: 2, 1>, scalar_prefetch = 0 : i64, scratch_operands = 0 : i64, tpu.core_type = #tpu.core_type<tc>, window_params = [{transform_indices = @transform_0, window_bounds = array<i64: 1, 4, 256>}, {pipeline_mode = #tpu.pipeline_mode<synchronous>, transform_indices = @transform_1, window_bounds = array<i64: 2, 4, 1>}, {transform_indices = @transform_2, window_bounds = array<i64: 1, 4, 256>}]} {
    %c0 = arith.constant 0 : index
    %c0_0 = arith.constant 0 : index
    %c0_1 = arith.constant 0 : index
    %0 = vector.load %arg2[%c0, %c0_0, %c0_1] : memref<1x4x256xf32, #tpu.memory_space<vmem>>, vector<1x4x256xf32>
    %1 = vector.shape_cast %0 : vector<1x4x256xf32> to vector<4x256xf32>
    %2 = vector.extract_strided_slice %1 {offsets = [0, 0], sizes = [1, 256], strides = [1, 1]} : vector<4x256xf32> to vector<1x256xf32>
    %3 = arith.mulf %2, %2 : vector<1x256xf32>
    %4 = vector.extract_strided_slice %1 {offsets = [1, 0], sizes = [1, 256], strides = [1, 1]} : vector<4x256xf32> to vector<1x256xf32>
    %5 = arith.addf %2, %4 : vector<1x256xf32>
    %6 = arith.mulf %4, %4 : vector<1x256xf32>
    %7 = arith.addf %3, %6 : vector<1x256xf32>
    %8 = vector.extract_strided_slice %1 {offsets = [2, 0], sizes = [1, 256], strides = [1, 1]} : vector<4x256xf32> to vector<1x256xf32>
    %9 = arith.addf %5, %8 : vector<1x256xf32>
    %10 = arith.mulf %8, %8 : vector<1x256xf32>
    %11 = arith.addf %7, %10 : vector<1x256xf32>
    %12 = vector.extract_strided_slice %1 {offsets = [3, 0], sizes = [1, 256], strides = [1, 1]} : vector<4x256xf32> to vector<1x256xf32>
    %13 = arith.addf %9, %12 : vector<1x256xf32>
    %14 = arith.mulf %12, %12 : vector<1x256xf32>
    %15 = arith.addf %11, %14 : vector<1x256xf32>
    %cst = arith.constant 2.500000e-01 : f32
    %16 = vector.broadcast %cst : f32 to vector<1x256xf32>
    %17 = arith.mulf %13, %16 : vector<1x256xf32>
    %cst_2 = arith.constant 2.500000e-01 : f32
    %18 = vector.broadcast %cst_2 : f32 to vector<1x256xf32>
    %19 = arith.mulf %15, %18 : vector<1x256xf32>
    %20 = arith.mulf %17, %17 : vector<1x256xf32>
    %21 = arith.subf %19, %20 : vector<1x256xf32>
    %cst_3 = arith.constant 0.000000e+00 : f32
    %22 = vector.broadcast %cst_3 : f32 to vector<1x256xf32>
    %23 = arith.maximumf %21, %22 : vector<1x256xf32>
    %cst_4 = arith.constant 9.99999974E-6 : f32
    %24 = vector.broadcast %cst_4 : f32 to vector<1x256xf32>
    %25 = arith.addf %23, %24 : vector<1x256xf32>
    %26 = math.rsqrt %25 : vector<1x256xf32>
    %c0_5 = arith.constant 0 : index
    %c0_6 = arith.constant 0 : index
    %c0_7 = arith.constant 0 : index
    %27 = vector.load %arg3[%c0_5, %c0_6, %c0_7] : memref<2x4x1xf32, #tpu.memory_space<vmem>>, vector<1x4x1xf32>
    %28 = vector.shape_cast %27 : vector<1x4x1xf32> to vector<4x1xf32>
    %c1 = arith.constant 1 : index
    %c0_8 = arith.constant 0 : index
    %c0_9 = arith.constant 0 : index
    %29 = vector.load %arg3[%c1, %c0_8, %c0_9] : memref<2x4x1xf32, #tpu.memory_space<vmem>>, vector<1x4x1xf32>
    %30 = vector.shape_cast %29 : vector<1x4x1xf32> to vector<4x1xf32>
    %31 = vector.broadcast %28 : vector<4x1xf32> to vector<4x256xf32>
    %32 = vector.broadcast %26 : vector<1x256xf32> to vector<4x256xf32>
    %33 = arith.mulf %31, %32 : vector<4x256xf32>
    %34 = vector.broadcast %17 : vector<1x256xf32> to vector<4x256xf32>
    %35 = arith.subf %1, %34 : vector<4x256xf32>
    %36 = arith.mulf %35, %33 : vector<4x256xf32>
    %37 = vector.broadcast %30 : vector<4x1xf32> to vector<4x256xf32>
    %38 = arith.addf %36, %37 : vector<4x256xf32>
    %c0_10 = arith.constant 0 : index
    %c0_11 = arith.constant 0 : index
    %c0_12 = arith.constant 0 : index
    %39 = vector.load %arg4[%c0_10, %c0_11, %c0_12] : memref<1x4x256xf32, #tpu.memory_space<vmem>>, vector<1x4x256xf32>
    %40 = vector.shape_cast %39 : vector<1x4x256xf32> to vector<4x256xf32>
    %41 = vector.shape_cast %38 : vector<4x256xf32> to vector<1x4x256xf32>
    tpu.vector_store %arg4[%c0_10, %c0_11, %c0_12], %41 {strides = array<i32>} : memref<1x4x256xf32, #tpu.memory_space<vmem>>, vector<1x4x256xf32>,
    return
  }
  func.func @transform_0(%arg0: i32, %arg1: i32) -> (i32, i32, i32) {
    %c0_i32 = arith.constant 0 : i32
    %c0_i32_0 = arith.constant 0 : i32
    return %arg0, %c0_i32, %arg1 : i32, i32, i32
  }
  func.func @transform_1(%arg0: i32, %arg1: i32) -> (i32, i32, i32) {
    %c0_i32 = arith.constant 0 : i32
    %c0_i32_0 = arith.constant 0 : i32
    %c0_i32_1 = arith.constant 0 : i32
    %c0_i32_2 = arith.constant 0 : i32
    return %c0_i32, %c0_i32_0, %c0_i32_1 : i32, i32, i32
  }
  func.func @transform_2(%arg0: i32, %arg1: i32) -> (i32, i32, i32) {
    %c0_i32 = arith.constant 0 : i32
    %c0_i32_0 = arith.constant 0 : i32
    return %arg0, %c0_i32, %arg1 : i32, i32, i32
  }
}

</mosaic_0001>

<llo_original>
// kernel: tpu_custom_call.1
$region0: #{tpu_custom_call.1}
  #allocation0 [shape = 'u32[]', space=smem, size = 0x4, offset = 0x4, fixed_abs, tag = 'smem constant byte address 0x4 - core index']
  #allocation1 [shape = 'u32[144,128]{1,0:T(1,128)}', space=vmem, size = 0x12000, scoped, tag = 'internal scratch']
  %s0 = inlined_call_operand.hbm [shape: f32[2,4,256], index: 0, kind: input, shape index: {}]
  %s1 = inlined_call_operand.vmem [shape: f32[2,4,1], index: 1, kind: input, shape index: {}]
  %s2 = inlined_call_operand.hbm [shape: f32[2,4,256], index: 2, kind: output, shape index: {}]
  %s3 = sld [smem:[#allocation0]]
  $region45: #{tpu_custom_call.1} parent=0
    _
  %s5 = ssub.s32 1, %s3
  %s6 = scalar_select 0, %s5, %s3
  $region1: #{tpu_custom_call.1} parent=0
    #allocation2 [shape = 'u8[8192]{0}', space=vmem, size = 0x2000, scoped, tag = 'input window, operand 0']
    #allocation3 [shape = 's32[2]{0}', space=sflag, size = 0x8, scoped, tag = 'scoped memory for tpu_custom_call.1']
    #allocation4 [shape = 's32[2]{0}', space=sflag, size = 0x8, scoped, tag = 'scoped memory for tpu_custom_call.1']
    #allocation5 [shape = 'u8[8192]{0}', space=vmem, size = 0x2000, scoped, tag = 'output window, operand 0']
    %7 = vsyncpa [#allocation3], 0
    %s8 = scalar_lea.sflag [#allocation3], 1
    %9 = vsyncpa %s8, 0
    %10 = vsyncpa [#allocation4], 0
    %s11 = scalar_lea.sflag [#allocation4], 1
    %12 = vsyncpa %s11, 0
    loop: start=0, step=1, limit=4
    $region2: #{tpu_custom_call.1} parent=1 // loop_pre_header
      _
    $region3: #{tpu_custom_call.1} parent=1 // loop_header
      %s14 = sphi 0, %s18
      %p15 = scmp.ge.s32.totalorder %s14, 4
      %s21 = sphi 0, %s33
      %s22 = sphi 0, %s29
      %s23 = sphi 0, %s21
      %s24 = sphi 0, %s22
      %s25 = sphi 0, %s23
      %s26 = sphi 0, %s24
      %s38 = sphi 0, %s40
      %s41 = sphi 0, %s38
      %s42 = sphi 0, %s41
      %s58 = sphi 0, %s42
      %s62 = sphi 0, %s62
      %s64 = sphi 0, %s62
      %s65 = sphi 0, %s64
      %s79 = sphi 0, %s65
      %s87 = sphi 0, %s89
      %s90 = sphi 0, %s87
      %s91 = sphi 0, %s90
      %s107 = sphi 0, %s91
    $region4: #{tpu_custom_call.1} parent=1 // loop_header_branch
      %17 = sbr.rel (%p15) target = $region8
    $region5: #{tpu_custom_call.1} parent=1 // loop_body
      %s19 = ssub.s32 %s14, 1
      %s20 = ssub.s32 %s14, 2
      %s27 = sadd.s32 1, %s22
      %p28 = scmp.ge.s32.totalorder %s27, 1
      %s29 = scalar_select %p28, 0, %s27
      %s30 = sadd.s32 1, %s21
      %s31 = scalar_select %p28, %s30, %s21
      %p32 = scmp.ge.s32.totalorder %s31, 2
      %s33 = scalar_select %p32, 0, %s31
      %s34 = ssub.s32 %s21, %s33
      %s35 = ssub.s32 %s22, %s29
      %s36 = sor.u32 %s34, %s35
      %p37 = scmp.eq.s32.totalorder %s36, 0
      %s39 = sadd.s32 %s38, 1
      %s40 = scalar_select %p37, %s38, %s39
      %p43 = pneg %p37
      %p44 = scmp.eq.s32.totalorder %s14, 1
      %p45 = por %p43, %p44
      %p46 = scmp.ne.s32.totalorder %s38, %s41
      %p47 = scmp.eq.s32.totalorder %s14, 0
      %p48 = por %p46, %p47
      %p49 = scmp.ne.s32.totalorder %s38, %s41
      %p50 = scmp.eq.s32.totalorder %s19, 1
      %p51 = por %p49, %p50
      %p52 = scmp.ne.s32.totalorder %s41, %s42
      %p53 = scmp.eq.s32.totalorder %s19, 0
      %p54 = por %p52, %p53
      %p55 = scmp.ne.s32.totalorder %s41, %s42
      %p56 = scmp.eq.s32.totalorder %s20, 1
      %p57 = por %p55, %p56
      %p59 = scmp.ne.s32.totalorder %s42, %s58
      %p60 = scmp.eq.s32.totalorder %s20, 0
      %p61 = por %p59, %p60
      %s63 = sadd.s32 %s62, 1
      %p66 = scmp.eq.s32.totalorder %s14, 1
      %p67 = scmp.ne.s32.totalorder %s62, %s64
      %p68 = scmp.eq.s32.totalorder %s14, 0
      %p69 = por %p67, %p68
      %p70 = scmp.ne.s32.totalorder %s62, %s64
      %p71 = scmp.eq.s32.totalorder %s19, 1
      %p72 = por %p70, %p71
      %p73 = scmp.ne.s32.totalorder %s64, %s65
      %p74 = scmp.eq.s32.totalorder %s19, 0
      %p75 = por %p73, %p74
      %p76 = scmp.ne.s32.totalorder %s64, %s65
      %p77 = scmp.eq.s32.totalorder %s20, 1
      %p78 = por %p76, %p77
      %p80 = scmp.ne.s32.totalorder %s65, %s79
      %p81 = scmp.eq.s32.totalorder %s20, 0
      %p82 = por %p80, %p81
      %s83 = ssub.s32 %s21, %s33
      %s84 = ssub.s32 %s22, %s29
      %s85 = sor.u32 %s83, %s84
      %p86 = scmp.eq.s32.totalorder %s85, 0
      %s88 = sadd.s32 %s87, 1
      %s89 = scalar_select %p86, %s87, %s88
      %p92 = pneg %p86
      %p93 = scmp.eq.s32.totalorder %s14, 1
      %p94 = por %p92, %p93
      %p95 = scmp.ne.s32.totalorder %s87, %s90
      %p96 = scmp.eq.s32.totalorder %s14, 0
      %p97 = por %p95, %p96
      %p98 = scmp.ne.s32.totalorder %s87, %s90
      %p99 = scmp.eq.s32.totalorder %s19, 1
      %p100 = por %p98, %p99
      %p101 = scmp.ne.s32.totalorder %s90, %s91
      %p102 = scmp.eq.s32.totalorder %s19, 0
      %p103 = por %p101, %p102
      %p104 = scmp.ne.s32.totalorder %s90, %s91
      %p105 = scmp.eq.s32.totalorder %s20, 1
      %p106 = por %p104, %p105
      %p108 = scmp.ne.s32.totalorder %s91, %s107
      %p109 = scmp.eq.s32.totalorder %s20, 0
      %p110 = por %p108, %p109
      %p111 = scmp.le.s32.totalorder 1, %s14
      %p112 = scmp.lt.s32.totalorder %s14, 3
      %p113 = pnand %p111, %p112
      %p114 = pneg %p113
      // Predicated region
      $region9: #{tpu_custom_call.1} parent=5 // pred_check
        _
      $region10: #{tpu_custom_call.1} parent=5 // pred_check_branch
        %116 = sbr.rel (%p113) target = $region12
      $region11: #{tpu_custom_call.1} parent=5 // pred_region
        %s117 = ssub.s32 %s14, 1
        // Predicated region
        $region13: #{tpu_custom_call.1} parent=11 // pred_check
          %p118 = pneg %p75
        $region14: #{tpu_custom_call.1} parent=11 // pred_check_branch
          %120 = sbr.rel (%p118) target = $region16
        $region15: #{tpu_custom_call.1} parent=11 // pred_region
          _
        $region16: #{tpu_custom_call.1} parent=11 // pred_fallthru
          _
      $region12: #{tpu_custom_call.1} parent=5 // pred_fallthru
        _
      %p121 = scmp.lt.s32.totalorder %s14, 2
      // Predicated region
      $region17: #{tpu_custom_call.1} parent=5 // pred_check
        %p122 = pneg %p121
      $region18: #{tpu_custom_call.1} parent=5 // pred_check_branch
        %124 = sbr.rel (%p122) target = $region20
      $region19: #{tpu_custom_call.1} parent=5 // pred_region
        // Predicated region
        $region21: #{tpu_custom_call.1} parent=19 // pred_check
          %p125 = pneg %p48
        $region22: #{tpu_custom_call.1} parent=19 // pred_check_branch
          %127 = sbr.rel (%p125) target = $region24
        $region23: #{tpu_custom_call.1} parent=19 // pred_region
          %s128 = sand.u32 %s38, 1
          %s129 = scalar_lea.sflag [#allocation3], %s128
          %s130 = sand.u32 %s38, 1
          %s131 = smul.addr %s130, 8
          %s132 = scalar_lea.vmem [#allocation2], %s131
          %s133 = smul.u32 2, %s22
          %s135 = ssub.s32 128, 128
          %136 = vsyncadd %s129, %s135
          %s137 = smul.addr %s21, 2
          %s138 = sadd.s32 %s133, %s137
          %s139 = smul.addr %s138, 64
          %s140 = scalar_lea.hbm %s0, %s139
          %s142 = sshll.u32 %s132, 4
          %s143 = int_to_ptr.vmem [resolvable:$true] %s142
          %145 = dma.hbm_to_vmem [thread:$0]  %s140, 128, %s143, %s129
        $region24: #{tpu_custom_call.1} parent=19 // pred_fallthru
          _
      $region20: #{tpu_custom_call.1} parent=5 // pred_fallthru
        _
      %p146 = scmp.le.s32.totalorder 1, %s14
      %p147 = scmp.lt.s32.totalorder %s14, 3
      %p148 = pnand %p146, %p147
      %p149 = pneg %p148
      // Predicated region
      $region25: #{tpu_custom_call.1} parent=5 // pred_check
        _
      $region26: #{tpu_custom_call.1} parent=5 // pred_check_branch
        %151 = sbr.rel (%p148) target = $region28
      $region27: #{tpu_custom_call.1} parent=5 // pred_region
        %s152 = ssub.s32 %s14, 1
        %s153 = sand.u32 %s41, 1
        %s154 = scalar_lea.sflag [#allocation3], %s153
        %s155 = sand.u32 %s41, 1
        %s156 = smul.addr %s155, 8
        %s157 = scalar_lea.vmem [#allocation2], %s156
        // Predicated region
        $region29: #{tpu_custom_call.1} parent=27 // pred_check
          %p158 = pneg %p54
        $region30: #{tpu_custom_call.1} parent=27 // pred_check_branch
          %160 = sbr.rel (%p158) target = $region32
        $region31: #{tpu_custom_call.1} parent=27 // pred_region
          %161 = dma.done %s154, 128
        $region32: #{tpu_custom_call.1} parent=27 // pred_fallthru
          _
        %s162 = sand.u32 %s41, 1
        %s163 = scalar_lea.sflag [#allocation3], %s162
        %s164 = sand.u32 %s41, 1
        %s165 = smul.addr %s164, 8
        %s166 = scalar_lea.vmem [#allocation2], %s165
        %p167 = pneg %p54
        %p168 = pneg %p51
        %p169 = pneg %p75
        %p170 = pneg %p72
        %p171 = pneg %p103
        %p172 = pneg %p100
        %s173 = sand.u32 %s90, 1
        %s174 = scalar_lea.sflag [#allocation4], %s173
        %s175 = sand.u32 %s90, 1
        %s176 = smul.addr %s175, 8
        %s177 = scalar_lea.vmem [#allocation5], %s176
        %s178 = smul.u32 2, %s24
        %s179 = smul.u32 2, %s24
        %v180 = vld [vmem:[%s157] sm:$0xff]
        %v181 = vmul.f32 %v180, %v180
        %v183 = vrot.slane %v180, 5
        %v184 = vrot.slane %v183, 4
        %v186 = vadd.f32 %v180, %v184
        %v188 = vrot.slane %v181, 5
        %v189 = vrot.slane %v188, 4
        %v191 = vadd.f32 %v181, %v189
        %v192 = vrot.slane %v180, 6
        %v193 = vrot.slane %v192, 4
        %v195 = vadd.f32 %v186, %v193
        %v196 = vrot.slane %v181, 6
        %v197 = vrot.slane %v196, 4
        %v199 = vadd.f32 %v191, %v197
        %v200 = vrot.slane %v180, 7
        %v201 = vrot.slane %v200, 4
        %v203 = vadd.f32 %v195, %v201
        %v204 = vrot.slane %v181, 7
        %v205 = vrot.slane %v204, 4
        %v207 = vadd.f32 %v199, %v205
        %v208 = vmul.f32 %v203, 0.25
        %v209 = vmul.f32 %v207, 0.25
        %v210 = vmul.f32 %v208, %v208
        %v211 = vsub.f32 %v209, %v210
        %v212 = vmax.f32 %v211, 0.0
        %v213 = vadd.f32 %v212, 1e-05
        %v214 = vrsqrt.pop %v213
        %v215 = vld [vmem:[%s1] sm:$0xf]
        %s216 = scalar_lea.vmem %s1, 4
        %v217 = vld [vmem:[%s216] sm:$0xf]
        %219 = vset.pattern.permute.xlu0 0
        %220 = vperm.xlu0 %219, %v215
        %v221 = vpop.permute.xlu0 %220
        %v224 = vlaneseq
        %v225 = vshrl.u32 %v224, 7
        %v226 = vsub.s32 0, %v225
        %v227 = vrot.slane %v214, %v226
        %v228 = vlaneseq
        %v229 = vshrl.u32 %v228, 7
        %v230 = vsub.s32 4, %v229
        %v231 = vrot.slane %v214, %v230
        %v234 = vlaneseq
        %v235 = vshrl.u32 %v234, 7
        %v236 = vsub.s32 0, %v235
        %v237 = vrot.slane %v227, %v236
        %v238 = vlaneseq
        %v239 = vshrl.u32 %v238, 7
        %v240 = vsub.s32 0, %v239
        %v241 = vrot.slane %v231, %v240
        %v242 = vmul.f32 %v221, %v237
        %v243 = vmul.f32 %v221, %v241
        %v245 = vlaneseq
        %v246 = vshrl.u32 %v245, 7
        %v247 = vsub.s32 0, %v246
        %v248 = vrot.slane %v208, %v247
        %v249 = vlaneseq
        %v250 = vshrl.u32 %v249, 7
        %v251 = vsub.s32 4, %v250
        %v252 = vrot.slane %v208, %v251
        %v255 = vlaneseq
        %v256 = vshrl.u32 %v255, 7
        %v257 = vsub.s32 0, %v256
        %v258 = vrot.slane %v248, %v257
        %v259 = vlaneseq
        %v260 = vshrl.u32 %v259, 7
        %v261 = vsub.s32 0, %v260
        %v262 = vrot.slane %v252, %v261
        %v265 = vcombine.low %v258, %v262
        %v267 = vsub.f32 %v180, %v265
        %v270 = vcombine.low %v242, %v243
        %v272 = vmul.f32 %v267, %v270
        %274 = vset.pattern.permute.xlu0 0
        %275 = vperm.xlu0 %274, %v217
        %v276 = vpop.permute.xlu0 %275
        %v278 = vunpack.c.l.s4 839922192
        %v279 = vunpack.c.0.s8 %v278
        %v280 = vlaneseq
        %v281 = vshrl.u32 %v280, 7
        %v282 = vsub.s32 %v279, %v281
        %v283 = vrot.slane %v276, %v282
        %v285 = vadd.f32 %v272, %v283
        %286 = vst [vmem:[%s177] sm:$0xff] %v285
        %s287 = sand.u32 %s90, 1
        %s288 = scalar_lea.sflag [#allocation4], %s287
        %s289 = sand.u32 %s90, 1
        %s290 = smul.addr %s289, 8
        %s291 = scalar_lea.vmem [#allocation5], %s290
        // Predicated region
        $region33: #{tpu_custom_call.1} parent=27 // pred_check
          %p292 = pneg %p100
        $region34: #{tpu_custom_call.1} parent=27 // pred_check_branch
          %294 = sbr.rel (%p292) target = $region36
        $region35: #{tpu_custom_call.1} parent=27 // pred_region
          %s295 = smul.u32 2, %s24
          %s297 = ssub.s32 128, 128
          %298 = vsyncadd %s288, %s297
          %s299 = smul.addr %s23, 2
          %s300 = sadd.s32 %s295, %s299
          %s301 = smul.addr %s300, 64
          %s302 = scalar_lea.hbm %s2, %s301
          %s304 = sshll.u32 %s291, 4
          %s305 = int_to_ptr.vmem [resolvable:$true] %s304
          %307 = dma.vmem_to_hbm [thread:$0]  %s305, 128, %s302, %s288
        $region36: #{tpu_custom_call.1} parent=27 // pred_fallthru
          _
      $region28: #{tpu_custom_call.1} parent=5 // pred_fallthru
        _
      %p308 = scmp.le.s32.totalorder 2, %s14
      // Predicated region
      $region37: #{tpu_custom_call.1} parent=5 // pred_check
        %p309 = pneg %p308
      $region38: #{tpu_custom_call.1} parent=5 // pred_check_branch
        %311 = sbr.rel (%p309) target = $region40
      $region39: #{tpu_custom_call.1} parent=5 // pred_region
        %s312 = ssub.s32 %s14, 2
        // Predicated region
        $region41: #{tpu_custom_call.1} parent=39 // pred_check
          %p313 = pneg %p106
        $region42: #{tpu_custom_call.1} parent=39 // pred_check_branch
          %315 = sbr.rel (%p313) target = $region44
        $region43: #{tpu_custom_call.1} parent=39 // pred_region
          %s316 = sand.u32 %s91, 1
          %s317 = scalar_lea.sflag [#allocation4], %s316
          %s318 = sand.u32 %s91, 1
          %s319 = smul.addr %s318, 8
          %s320 = scalar_lea.vmem [#allocation5], %s319
          %321 = dma.done %s317, 128
        $region44: #{tpu_custom_call.1} parent=39 // pred_fallthru
          _
      $region40: #{tpu_custom_call.1} parent=5 // pred_fallthru
        _
    $region6: #{tpu_custom_call.1} parent=1 // loop_footer
      %s18 = sadd.s32 1, %s14
    $region7: #{tpu_custom_call.1} parent=1 // loop_footer_branch
      %13 = sbr.rel target = $region3
    $region8: #{tpu_custom_call.1} parent=1 // loop_exit
      _
    %322 = vsyncpa [#allocation3], 1
    %s323 = scalar_lea.sflag [#allocation3], 1
    %324 = vsyncpa %s323, 1
    %325 = vsyncpa [#allocation4], 1
    %s326 = scalar_lea.sflag [#allocation4], 1
    %327 = vsyncpa %s326, 1

</llo_original>
